<compile_context>
chip_gen: v7x
topology: tpu7x:2x2x1
jax: 0.10.0
libtpu: 0.0.40
codegen_flags: <defaults>
</compile_context>

<pallas_src>
import jax
import jax.numpy as jnp
from jax.experimental import pallas as pl
from jax.experimental.pallas import tpu as pltpu

_BLOCK_BUDGET_BYTES = 8 * 1024 * 1024     # double-buffered in+out blocks
_VMEM_LIMIT_BYTES = 32 * 1024 * 1024      # safe on v5e/v6e (128 MiB) and v7x (64 MiB)
_PLANE_SEL_CAP_BYTES = 2 * 1024 * 1024    # cap for the odd-H whole-plane selection matrix


def _select_matmul_kernel(x_ref, s_ref, o_ref):
    """out = x @ sel.  sel is a {0,1} selection matrix (exact pick)."""
    o_ref[...] = jnp.dot(
        x_ref[...], s_ref[...], preferred_element_type=jnp.float32
    ).astype(o_ref.dtype)


def _round_up(v, m):
    return ((v + m - 1) // m) * m


def _largest_divisor_leq(n, cap):
    for g in range(min(cap, n), 0, -1):
        if n % g == 0:
            return g
    return 1


def _rows_per_block(total_rows, bytes_per_row, budget_bytes=_BLOCK_BUDGET_BYTES):
    """Rows handled per grid step, sized to a VMEM budget, 32-sublane aligned."""
    r = max(int(budget_bytes // max(bytes_per_row, 1)), 1)
    if r >= total_rows:
        return total_rows          # full-extent block is always legal
    if r >= 32:
        return (r // 32) * 32      # native sublane tiling for all dtypes
    if r >= 8:
        return (r // 8) * 8
    return min(8, total_rows)


def _make_select_matrix(group_in, group_out, w, w_out, dtype):
    """S[a*w + k, p*w_out + j] = 1 iff a == 2*p and k == 2*j (else 0)."""
    rows = group_in * w
    cols = group_out * w_out
    ri = jax.lax.broadcasted_iota(jnp.int32, (rows, cols), 0)
    ci = jax.lax.broadcasted_iota(jnp.int32, (rows, cols), 1)
    a, k = ri // w, ri % w
    p, j = ci // w_out, ci % w_out
    return ((a == 2 * p) & (k == 2 * j)).astype(dtype)


def _select_pallas_call(x_arr, x_spec, sel, rows_total, m, rows_per_block, read_elems):
    itemsize = x_arr.dtype.itemsize
    k = sel.shape[0]
    grid = (pl.cdiv(rows_total, rows_per_block),)
    return pl.pallas_call(
        _select_matmul_kernel,
        out_shape=jax.ShapeDtypeStruct((rows_total, m), x_arr.dtype),
        grid_spec=pltpu.PrefetchScalarGridSpec(
            num_scalar_prefetch=0,
            grid=grid,
            in_specs=[
                x_spec,
                # Constant block index -> resident in VMEM, DMA'd once.
                pl.BlockSpec(sel.shape, lambda i: (0, 0)),
            ],
            out_specs=pl.BlockSpec((rows_per_block, m), lambda i: (i, 0)),
        ),
        compiler_params=pltpu.CompilerParams(
            # Row blocks are independent.
            # TODO(synk): try pltpu.CORE_PARALLEL on this axis for v7x (2 TCs)
            # once verified in a trace; plain "parallel" is a no-op on v5e/v6e.
            dimension_semantics=("parallel",),
            vmem_limit_bytes=_VMEM_LIMIT_BYTES,
        ),
        cost_estimate=pl.CostEstimate(
            flops=2 * rows_total * k * m,
            transcendentals=0,
            bytes_accessed=(read_elems + sel.size + rows_total * m) * itemsize,
        ),
    )(x_arr, sel)


def _run_parity(x, w, w_out, total_rows):
    """Large-W path: DMA-level even-row skip, (rows, W) @ (W, w_out)."""
    itemsize = x.dtype.itemsize
    x_rows = x.reshape(total_rows, 2, w)
    sel = _make_select_matrix(1, 1, w, w_out, x.dtype)
    rows = _rows_per_block(
        total_rows, 2 * itemsize * (_round_up(w, 128) + _round_up(w_out, 128)))
    # Squeeze the size-2 parity axis pinned to 0 -> odd rows never leave HBM.
    x_spec = pl.BlockSpec((rows, None, w), lambda i: (i, 0, 0))
    return _select_pallas_call(x_rows, x_spec, sel, total_rows, w_out, rows,
                               read_elems=total_rows * w)


def _run_grouped(x, w, w_out, group_in, group_out, num_groups):
    """Lane-dense path: contiguous (Rb, group_in*W) blocks, block-structured sel."""
    itemsize = x.dtype.itemsize
    l_dim = group_in * w
    m_dim = group_out * w_out
    x_flat = x.reshape(num_groups, l_dim)          # free, fully contiguous
    sel = _make_select_matrix(group_in, group_out, w, w_out, x.dtype)
    rows = _rows_per_block(
        num_groups, 2 * itemsize * (_round_up(l_dim, 128) + _round_up(m_dim, 128)))
    x_spec = pl.BlockSpec((rows, l_dim), lambda i: (i, 0))
    return _select_pallas_call(x_flat, x_spec, sel, num_groups, m_dim, rows,
                               read_elems=num_groups * l_dim)


def downsample_a(x: jax.Array, stride: int = 2) -> jax.Array:
    """Pallas implementation of DownsampleA.forward (NCHW in, NCHW out)."""
    assert stride == 2, "DownsampleA asserts stride == 2"
    assert jnp.issubdtype(x.dtype, jnp.floating), (
        "DownsampleA (AvgPool2d) expects a floating dtype")
    n, c, h, w = x.shape
    h_out = (h - 1) // 2 + 1
    w_out = (w - 1) // 2 + 1
    itemsize = x.dtype.itemsize

    if h % 2 == 1:
        # Copy-free odd-H handling: group whole planes through the same
        # selection kernel when the selection matrix stays small.
        plane_sel_bytes = (h * w) * (h_out * w_out) * itemsize
        if plane_sel_bytes <= _PLANE_SEL_CAP_BYTES:
            out = _run_grouped(x, w, w_out, group_in=h, group_out=h_out,
                               num_groups=n * c)
            return out.reshape(n, c, h_out, w_out)
        # Rare corner: odd H with a huge plane -> pad one never-read row.
        # TODO(synk): copy-free odd-H path for very large planes.
        x = jnp.pad(x, ((0, 0), (0, 0), (0, 1), (0, 0)))
        h = h + 1

    total_out_rows = n * c * h_out
    if w * itemsize >= 512:
        # Large W: per-row DMA chunks are burst-sized, skipping odd rows is a
        # genuine ~2x HBM read saving and w_out is already lane-dense-ish.
        out = _run_parity(x, w, w_out, total_out_rows)
    else:
        # Small W (typical DownsampleA shapes): repack to lane-dense blocks.
        g_target = min(pl.cdiv(128, w_out), total_out_rows)
        g = _largest_divisor_leq(total_out_rows, g_target)
        out = _run_grouped(x, w, w_out, group_in=2 * g, group_out=g,
                           num_groups=total_out_rows // g)
    return out.reshape(n, c, h_out, w_out)


if __name__ == "__main__":
    # DownsampleA has no parameters (kernel_size=1 avg pool only).
    key = jax.random.PRNGKey(0)
    x = jax.random.normal(key, (2, 4, 16, 16), dtype=jnp.float32)
    out = jax.block_until_ready(downsample_a(x, stride=2))
    ref = x[:, :, ::2, ::2]
    assert out.shape == ref.shape == (2, 4, 8, 8), out.shape
    assert out.dtype == x.dtype
    assert jnp.array_equal(out, ref), "mismatch vs reference (small-W path)"

    # Exercise the large-W parity-squeeze path.
    x2 = jax.random.normal(jax.random.PRNGKey(1), (1, 2, 8, 256), dtype=jnp.float32)
    out2 = jax.block_until_ready(downsample_a(x2))
    assert jnp.array_equal(out2, x2[:, :, ::2, ::2]), "mismatch (large-W path)"

    # Exercise the copy-free odd-H whole-plane path.
    x3 = jax.random.normal(jax.random.PRNGKey(2), (2, 3, 7, 12), dtype=jnp.float32)
    out3 = jax.block_until_ready(downsample_a(x3))
    assert jnp.array_equal(out3, x3[:, :, ::2, ::2]), "mismatch (odd-H path)"

    print("KERNEL_OK")
</pallas_src>

<mosaic_0001>
module attributes {stable_mosaic.version = 11 : i64} {
  func.func @_select_matmul_kernel(%arg0: i32, %arg1: memref<4x512xf32, #tpu.memory_space<vmem>>, %arg2: memref<512x128xf32, #tpu.memory_space<vmem>>, %arg3: memref<4x128xf32, #tpu.memory_space<vmem>>) attributes {dimension_semantics = [#tpu.dimension_semantics<parallel>], iteration_bounds = array<i64: 1>, scalar_prefetch = 0 : i64, scratch_operands = 0 : i64, tpu.core_type = #tpu.core_type<tc>, window_params = [{transform_indices = @transform_0, window_bounds = array<i64: 4, 512>}, {pipeline_mode = #tpu.pipeline_mode<synchronous>, transform_indices = @transform_1, window_bounds = array<i64: 512, 128>}, {transform_indices = @transform_2, window_bounds = array<i64: 4, 128>}]} {
    %c0 = arith.constant 0 : index
    %c0_0 = arith.constant 0 : index
    %0 = vector.load %arg1[%c0, %c0_0] : memref<4x512xf32, #tpu.memory_space<vmem>>, vector<4x512xf32>
    %c0_1 = arith.constant 0 : index
    %c0_2 = arith.constant 0 : index
    %1 = vector.load %arg2[%c0_1, %c0_2] : memref<512x128xf32, #tpu.memory_space<vmem>>, vector<512x128xf32>
    %cst = arith.constant dense<0.000000e+00> : vector<4x128xf32>
    %2 = tpu.matmul %0, %1, %cst {dimension_numbers = #tpu.dot_dimension_numbers<[1], [0], [0], [1], [0, 0, 1, 1], [], []>} : vector<4x512xf32>, vector<512x128xf32>, vector<4x128xf32> -> vector<4x128xf32>
    %c0_3 = arith.constant 0 : index
    %c0_4 = arith.constant 0 : index
    %3 = vector.load %arg3[%c0_3, %c0_4] : memref<4x128xf32, #tpu.memory_space<vmem>>, vector<4x128xf32>
    tpu.vector_store %arg3[%c0_3, %c0_4], %2 {strides = array<i32>} : memref<4x128xf32, #tpu.memory_space<vmem>>, vector<4x128xf32>,
    return
  }
  func.func @transform_0(%arg0: i32) -> (i32, i32) {
    %c0_i32 = arith.constant 0 : i32
    %c0_i32_0 = arith.constant 0 : i32
    return %arg0, %c0_i32 : i32, i32
  }
  func.func @transform_1(%arg0: i32) -> (i32, i32) {
    %c0_i32 = arith.constant 0 : i32
    %c0_i32_0 = arith.constant 0 : i32
    %c0_i32_1 = arith.constant 0 : i32
    return %c0_i32, %c0_i32_0 : i32, i32
  }
  func.func @transform_2(%arg0: i32) -> (i32, i32) {
    %c0_i32 = arith.constant 0 : i32
    %c0_i32_0 = arith.constant 0 : i32
    return %arg0, %c0_i32 : i32, i32
  }
}

</mosaic_0001>

<llo_original>
// kernel: tpu_custom_call.1
$region0: #{tpu_custom_call.1}
  #allocation0 [shape = 'u32[]', space=smem, size = 0x4, offset = 0x4, fixed_abs, tag = 'smem constant byte address 0x4 - core index']
  #allocation1 [shape = 'u32[144,128]{1,0:T(1,128)}', space=vmem, size = 0x12000, scoped, tag = 'internal scratch']
  %s0 = inlined_call_operand.hbm [shape: f32[4,512], index: 0, kind: input, shape index: {}]
  %s1 = inlined_call_operand.hbm [shape: f32[512,128], index: 1, kind: input, shape index: {}]
  %s2 = inlined_call_operand.hbm [shape: f32[4,128], index: 2, kind: output, shape index: {}]
  %s3 = sld [smem:[#allocation0]]
  $region26: #{tpu_custom_call.1} parent=0
    _
  %s5 = ssub.s32 1, %s3
  %s6 = scalar_select 0, %s5, %s3
  $region1: #{tpu_custom_call.1} parent=0
    #allocation2 [shape = 'u8[8192]{0}', space=vmem, size = 0x2000, scoped, tag = 'input window, operand 0, single buffered']
    #allocation3 [shape = 's32[1]{0}', space=sflag, size = 0x4, scoped, tag = 'scoped memory for tpu_custom_call.1']
    #allocation4 [shape = 's32[1]{0}', space=sflag, size = 0x4, scoped, tag = 'scoped memory for tpu_custom_call.1']
    #allocation5 [shape = 'u8[262144]{0}', space=vmem, size = 0x40000, scoped, tag = 'input window, operand 1, single buffered']
    #allocation6 [shape = 's32[1]{0}', space=sflag, size = 0x4, scoped, tag = 'scoped memory for tpu_custom_call.1']
    #allocation7 [shape = 'u8[2048]{0}', space=vmem, size = 0x800, scoped, tag = 'output window, operand 0, single buffered']
    %7 = vsyncpa [#allocation3], 0
    %8 = vsyncpa [#allocation6], 0
    %9 = vsyncpa [#allocation4], 0
    // Predicated region
    $region2: #{tpu_custom_call.1} parent=1 // pred_check
      _
    $region3: #{tpu_custom_call.1} parent=1 // pred_check_branch
      %11 = sbr.rel (0) target = $region5
    $region4: #{tpu_custom_call.1} parent=1 // pred_region
      %s13 = ssub.s32 256, 256
      %14 = vsyncadd [#allocation3], %s13
      %s16 = sshll.u32 [#allocation2], 4
      %s17 = int_to_ptr.vmem [resolvable:$true] %s16
      %19 = dma.hbm_to_vmem [thread:$0]  %s0, 256, %s17, [#allocation3]
    $region5: #{tpu_custom_call.1} parent=1 // pred_fallthru
      _
    // Predicated region
    $region6: #{tpu_custom_call.1} parent=1 // pred_check
      _
    $region7: #{tpu_custom_call.1} parent=1 // pred_check_branch
      %21 = sbr.rel (0) target = $region9
    $region8: #{tpu_custom_call.1} parent=1 // pred_region
      %s23 = ssub.s32 8192, 8192
      %24 = vsyncadd [#allocation6], %s23
      %s25 = sshll.u32 [#allocation5], 4
      %s26 = int_to_ptr.vmem [resolvable:$true] %s25
      %31 = dma.hbm_to_vmem [thread:$0]  %s1, 8192, %s26, [#allocation6], 128, 128, 8
    $region9: #{tpu_custom_call.1} parent=1 // pred_fallthru
      _
    // Predicated region
    $region10: #{tpu_custom_call.1} parent=1 // pred_check
      _
    $region11: #{tpu_custom_call.1} parent=1 // pred_check_branch
      %33 = sbr.rel (0) target = $region13
    $region12: #{tpu_custom_call.1} parent=1 // pred_region
      %34 = dma.done [#allocation3], 256
    $region13: #{tpu_custom_call.1} parent=1 // pred_fallthru
      _
    // Predicated region
    $region14: #{tpu_custom_call.1} parent=1 // pred_check
      _
    $region15: #{tpu_custom_call.1} parent=1 // pred_check_branch
      %36 = sbr.rel (0) target = $region17
    $region16: #{tpu_custom_call.1} parent=1 // pred_region
      %37 = dma.done [#allocation6], 8192
    $region17: #{tpu_custom_call.1} parent=1 // pred_fallthru
      _
    %v38 = vld [vmem:[#allocation2] sm:$0xff]
    %v39 = vld [vmem:[#allocation2 + $0x8] sm:$0xff]
    %v40 = vld [vmem:[#allocation5] sm:$0xff]
    %v41 = vld [vmem:[#allocation5 + $0x8] sm:$0xff]
    %v42 = vld [vmem:[#allocation5 + $0x10] sm:$0xff]
    %v43 = vld [vmem:[#allocation5 + $0x18] sm:$0xff]
    %v44 = vld [vmem:[#allocation5 + $0x20] sm:$0xff]
    %v45 = vld [vmem:[#allocation5 + $0x28] sm:$0xff]
    %v46 = vld [vmem:[#allocation5 + $0x30] sm:$0xff]
    %v47 = vld [vmem:[#allocation5 + $0x38] sm:$0xff]
    %v48 = vld [vmem:[#allocation5 + $0x40] sm:$0xff]
    %v49 = vld [vmem:[#allocation5 + $0x48] sm:$0xff]
    %v50 = vld [vmem:[#allocation5 + $0x50] sm:$0xff]
    %v51 = vld [vmem:[#allocation5 + $0x58] sm:$0xff]
    %v52 = vld [vmem:[#allocation5 + $0x60] sm:$0xff]
    %v53 = vld [vmem:[#allocation5 + $0x68] sm:$0xff]
    %v54 = vld [vmem:[#allocation5 + $0x70] sm:$0xff]
    %v55 = vld [vmem:[#allocation5 + $0x78] sm:$0xff]
    %v56 = vld [vmem:[#allocation5 + $0x80] sm:$0xff]
    %v57 = vld [vmem:[#allocation5 + $0x88] sm:$0xff]
    %v58 = vld [vmem:[#allocation5 + $0x90] sm:$0xff]
    %v59 = vld [vmem:[#allocation5 + $0x98] sm:$0xff]
    %v60 = vld [vmem:[#allocation5 + $0xa0] sm:$0xff]
    %v61 = vld [vmem:[#allocation5 + $0xa8] sm:$0xff]
    %v62 = vld [vmem:[#allocation5 + $0xb0] sm:$0xff]
    %v63 = vld [vmem:[#allocation5 + $0xb8] sm:$0xff]
    %v64 = vld [vmem:[#allocation5 + $0xc0] sm:$0xff]
    %v65 = vld [vmem:[#allocation5 + $0xc8] sm:$0xff]
    %v66 = vld [vmem:[#allocation5 + $0xd0] sm:$0xff]
    %v67 = vld [vmem:[#allocation5 + $0xd8] sm:$0xff]
    %v68 = vld [vmem:[#allocation5 + $0xe0] sm:$0xff]
    %v69 = vld [vmem:[#allocation5 + $0xe8] sm:$0xff]
    %v70 = vld [vmem:[#allocation5 + $0xf0] sm:$0xff]
    %v71 = vld [vmem:[#allocation5 + $0xf8] sm:$0xff]
    %v72 = vld [vmem:[#allocation5 + $0x100] sm:$0xff]
    %v73 = vld [vmem:[#allocation5 + $0x108] sm:$0xff]
    %v74 = vld [vmem:[#allocation5 + $0x110] sm:$0xff]
    %v75 = vld [vmem:[#allocation5 + $0x118] sm:$0xff]
    %v76 = vld [vmem:[#allocation5 + $0x120] sm:$0xff]
    %v77 = vld [vmem:[#allocation5 + $0x128] sm:$0xff]
    %v78 = vld [vmem:[#allocation5 + $0x130] sm:$0xff]
    %v79 = vld [vmem:[#allocation5 + $0x138] sm:$0xff]
    %v80 = vld [vmem:[#allocation5 + $0x140] sm:$0xff]
    %v81 = vld [vmem:[#allocation5 + $0x148] sm:$0xff]
    %v82 = vld [vmem:[#allocation5 + $0x150] sm:$0xff]
    %v83 = vld [vmem:[#allocation5 + $0x158] sm:$0xff]
    %v84 = vld [vmem:[#allocation5 + $0x160] sm:$0xff]
    %v85 = vld [vmem:[#allocation5 + $0x168] sm:$0xff]
    %v86 = vld [vmem:[#allocation5 + $0x170] sm:$0xff]
    %v87 = vld [vmem:[#allocation5 + $0x178] sm:$0xff]
    %v88 = vld [vmem:[#allocation5 + $0x180] sm:$0xff]
    %v89 = vld [vmem:[#allocation5 + $0x188] sm:$0xff]
    %v90 = vld [vmem:[#allocation5 + $0x190] sm:$0xff]
    %v91 = vld [vmem:[#allocation5 + $0x198] sm:$0xff]
    %v92 = vld [vmem:[#allocation5 + $0x1a0] sm:$0xff]
    %v93 = vld [vmem:[#allocation5 + $0x1a8] sm:$0xff]
    %v94 = vld [vmem:[#allocation5 + $0x1b0] sm:$0xff]
    %v95 = vld [vmem:[#allocation5 + $0x1b8] sm:$0xff]
    %v96 = vld [vmem:[#allocation5 + $0x1c0] sm:$0xff]
    %v97 = vld [vmem:[#allocation5 + $0x1c8] sm:$0xff]
    %v98 = vld [vmem:[#allocation5 + $0x1d0] sm:$0xff]
    %v99 = vld [vmem:[#allocation5 + $0x1d8] sm:$0xff]
    %v100 = vld [vmem:[#allocation5 + $0x1e0] sm:$0xff]
    %v101 = vld [vmem:[#allocation5 + $0x1e8] sm:$0xff]
    %v102 = vld [vmem:[#allocation5 + $0x1f0] sm:$0xff]
    %v103 = vld [vmem:[#allocation5 + $0x1f8] sm:$0xff]
    %v106 = vcombine.high %v38, %v38
    %v107 = vcombine.high %v39, %v39
    %110 = vmatprep.subr.mxu0 0.0
    %111 = vmatpush1.msra.mxu0 %v40
    %112 = vmatprep.subr.mxu0 0.0
    %113 = vmatpush1.msra.mxu0 %v41
    %114 = vmatprep.subr.mxu0 0.0
    %115 = vmatpush1.msra.mxu0 %v42
    %116 = vmatprep.subr.mxu0 0.0
    %117 = vmatpush1.msra.mxu0 %v43
    %118 = vmatprep.subr.mxu0 0.0
    %119 = vmatpush1.msra.mxu0 %v44
    %120 = vmatprep.subr.mxu0 0.0
    %121 = vmatpush1.msra.mxu0 %v45
    %122 = vmatprep.subr.mxu0 0.0
    %123 = vmatpush1.msra.mxu0 %v46
    %124 = vmatprep.subr.mxu0 0.0
    %125 = vmatpush1.msra.mxu0 %v47
    %126 = vmatprep.subr.mxu0 0.0
    %127 = vmatpush1.msra.mxu0 %v48
    %128 = vmatprep.subr.mxu0 0.0
    %129 = vmatpush1.msra.mxu0 %v49
    %130 = vmatprep.subr.mxu0 0.0
    %131 = vmatpush1.msra.mxu0 %v50
    %132 = vmatprep.subr.mxu0 0.0
    %133 = vmatpush1.msra.mxu0 %v51
    %134 = vmatprep.subr.mxu0 0.0
    %135 = vmatpush1.msra.mxu0 %v52
    %136 = vmatprep.subr.mxu0 0.0
    %137 = vmatpush1.msra.mxu0 %v53
    %138 = vmatprep.subr.mxu0 0.0
    %139 = vmatpush1.msra.mxu0 %v54
    %140 = vmatprep.subr.mxu0 0.0
    %141 = vmatpush1.msra.mxu0 %v55
    %142 = vmatprep.subr.mxu0 0.0
    %143 = vmatpush1.msra.mxu0 %v56
    %144 = vmatprep.subr.mxu0 0.0
    %145 = vmatpush1.msra.mxu0 %v57
    %146 = vmatprep.subr.mxu0 0.0
    %147 = vmatpush1.msra.mxu0 %v58
    %148 = vmatprep.subr.mxu0 0.0
    %149 = vmatpush1.msra.mxu0 %v59
    %150 = vmatprep.subr.mxu0 0.0
    %151 = vmatpush1.msra.mxu0 %v60
    %152 = vmatprep.subr.mxu0 0.0
    %153 = vmatpush1.msra.mxu0 %v61
    %154 = vmatprep.subr.mxu0 0.0
    %155 = vmatpush1.msra.mxu0 %v62
    %156 = vmatprep.subr.mxu0 0.0
    %157 = vmatpush1.msra.mxu0 %v63
    %158 = vmatprep.subr.mxu0 0.0
    %159 = vmatpush1.msra.mxu0 %v64
    %160 = vmatprep.subr.mxu0 0.0
    %161 = vmatpush1.msra.mxu0 %v65
    %162 = vmatprep.subr.mxu0 0.0
    %163 = vmatpush1.msra.mxu0 %v66
    %164 = vmatprep.subr.mxu0 0.0
    %165 = vmatpush1.msra.mxu0 %v67
    %166 = vmatprep.subr.mxu0 0.0
    %167 = vmatpush1.msra.mxu0 %v68
    %168 = vmatprep.subr.mxu0 0.0
    %169 = vmatpush1.msra.mxu0 %v69
    %170 = vmatprep.subr.mxu0 0.0
    %171 = vmatpush1.msra.mxu0 %v70
    %172 = vmatprep.subr.mxu0 0.0
    %173 = vmatpush1.msra.mxu0 %v71
    %174 = vmatprep.mubr.f32.mxu0 %v106
    %175 = vmatmul.mubr.f32.gmra.mrb[0].mxu0 %v38
    %v176 = vpop.f32.mrb[0].mxu0
    %v177 = vadd.f32 0.0, %v176
    %v178 = vpop.f32.mrb[0].mxu0
    %179 = vdwg.mxu0
    %180 = vmatprep.subr.mxu0 0.0
    %181 = vmatpush1.msra.mxu0 %v72
    %182 = vmatprep.subr.mxu0 0.0
    %183 = vmatpush1.msra.mxu0 %v73
    %184 = vmatprep.subr.mxu0 0.0
    %185 = vmatpush1.msra.mxu0 %v74
    %186 = vmatprep.subr.mxu0 0.0
    %187 = vmatpush1.msra.mxu0 %v75
    %188 = vmatprep.subr.mxu0 0.0
    %189 = vmatpush1.msra.mxu0 %v76
    %190 = vmatprep.subr.mxu0 0.0
    %191 = vmatpush1.msra.mxu0 %v77
    %192 = vmatprep.subr.mxu0 0.0
    %193 = vmatpush1.msra.mxu0 %v78
    %194 = vmatprep.subr.mxu0 0.0
    %195 = vmatpush1.msra.mxu0 %v79
    %196 = vmatprep.subr.mxu0 0.0
    %197 = vmatpush1.msra.mxu0 %v80
    %198 = vmatprep.subr.mxu0 0.0
    %199 = vmatpush1.msra.mxu0 %v81
    %200 = vmatprep.subr.mxu0 0.0
    %201 = vmatpush1.msra.mxu0 %v82
    %202 = vmatprep.subr.mxu0 0.0
    %203 = vmatpush1.msra.mxu0 %v83
    %204 = vmatprep.subr.mxu0 0.0
    %205 = vmatpush1.msra.mxu0 %v84
    %206 = vmatprep.subr.mxu0 0.0
    %207 = vmatpush1.msra.mxu0 %v85
    %208 = vmatprep.subr.mxu0 0.0
    %209 = vmatpush1.msra.mxu0 %v86
    %210 = vmatprep.subr.mxu0 0.0
    %211 = vmatpush1.msra.mxu0 %v87
    %212 = vmatprep.subr.mxu0 0.0
    %213 = vmatpush1.msra.mxu0 %v88
    %214 = vmatprep.subr.mxu0 0.0
    %215 = vmatpush1.msra.mxu0 %v89
    %216 = vmatprep.subr.mxu0 0.0
    %217 = vmatpush1.msra.mxu0 %v90
    %218 = vmatprep.subr.mxu0 0.0
    %219 = vmatpush1.msra.mxu0 %v91
    %220 = vmatprep.subr.mxu0 0.0
    %221 = vmatpush1.msra.mxu0 %v92
    %222 = vmatprep.subr.mxu0 0.0
    %223 = vmatpush1.msra.mxu0 %v93
    %224 = vmatprep.subr.mxu0 0.0
    %225 = vmatpush1.msra.mxu0 %v94
    %226 = vmatprep.subr.mxu0 0.0
    %227 = vmatpush1.msra.mxu0 %v95
    %228 = vmatprep.subr.mxu0 0.0
    %229 = vmatpush1.msra.mxu0 %v96
    %230 = vmatprep.subr.mxu0 0.0
    %231 = vmatpush1.msra.mxu0 %v97
    %232 = vmatprep.subr.mxu0 0.0
    %233 = vmatpush1.msra.mxu0 %v98
    %234 = vmatprep.subr.mxu0 0.0
    %235 = vmatpush1.msra.mxu0 %v99
    %236 = vmatprep.subr.mxu0 0.0
    %237 = vmatpush1.msra.mxu0 %v100
    %238 = vmatprep.subr.mxu0 0.0
    %239 = vmatpush1.msra.mxu0 %v101
    %240 = vmatprep.subr.mxu0 0.0
    %241 = vmatpush1.msra.mxu0 %v102
    %242 = vmatprep.subr.mxu0 0.0
    %243 = vmatpush1.msra.mxu0 %v103
    %244 = vmatprep.mubr.f32.mxu0 %v107
    %245 = vmatmul.mubr.f32.gmra.mrb[0].mxu0 %v39
    %v246 = vpop.f32.mrb[0].mxu0
    %v247 = vadd.f32 %v177, %v246
    %v248 = vpop.f32.mrb[0].mxu0
    %249 = vdwg.mxu0
    %250 = vst [vmem:[#allocation7] sm:$0xf] %v247
    // Predicated region
    $region18: #{tpu_custom_call.1} parent=1 // pred_check
      _
    $region19: #{tpu_custom_call.1} parent=1 // pred_check_branch
      %252 = sbr.rel (0) target = $region21
    $region20: #{tpu_custom_call.1} parent=1 // pred_region
      %s254 = ssub.s32 64, 64
      %255 = vsyncadd [#allocation4], %s254
      %s257 = sshll.u32 [#allocation7], 4
      %s258 = int_to_ptr.vmem [resolvable:$true] %s257
      %260 = dma.vmem_to_hbm [thread:$0]  %s258, 64, %s2, [#allocation4]
    $region21: #{tpu_custom_call.1} parent=1 // pred_fallthru
      _
    // Predicated region
    $region22: #{tpu_custom_call.1} parent=1 // pred_check
      _
    $region23: #{tpu_custom_call.1} parent=1 // pred_check_branch
      %262 = sbr.rel (0) target = $region25
    $region24: #{tpu_custom_call.1} parent=1 // pred_region
      %263 = dma.done [#allocation4], 64
    $region25: #{tpu_custom_call.1} parent=1 // pred_fallthru
      _
    %264 = vsyncpa [#allocation3], 1
    %265 = vsyncpa [#allocation6], 1
    %266 = vsyncpa [#allocation4], 1

</llo_original>
